<compile_context>
chip_gen: v6e
topology: v6e:2x2x1
jax: 0.10.0
libtpu: 0.0.40
codegen_flags: <defaults>
</compile_context>

<pallas_src>
import functools

import jax
import jax.numpy as jnp
from jax import lax
from jax.experimental import pallas as pl
from jax.experimental.pallas import tpu as pltpu


def _round_up(x, m):
    return (x + m - 1) // m * m


def rbm_kernel(v_ref, w_ref, wt_ref, hb_ref, vb_ref, uh_ref, uv_ref,
               pre_h_ref, h_ref, pre_v_ref, v_out_ref, *, k):
    tb = v_ref.shape[0]

    W = w_ref[...]    # (n_hin, n_vis) bf16 — used for h -> v  (h @ W)
    Wt = wt_ref[...]  # (n_vis, n_hin) bf16 — used for v -> h  (v @ W.T)

    # Hoist bias broadcasts out of the unrolled Gibbs chain (no CSE of
    # broadcast_in_dim otherwise).
    hb = jnp.broadcast_to(hb_ref[...], (tb, hb_ref.shape[1]))
    vb = jnp.broadcast_to(vb_ref[...], (tb, vb_ref.shape[1]))

    def v_to_h(vv, u):
        # F.linear(v, W, h_bias) = v @ W.T + h_bias
        logits = lax.dot_general(vv.astype(jnp.bfloat16), Wt,
                                 (((1,), (0,)), ((), ())),
                                 preferred_element_type=jnp.float32) + hb
        p = jax.nn.sigmoid(logits)
        # relu(sign(p - u)) == 1.0 where p > u else 0.0
        return p, (p > u).astype(jnp.float32)

    def h_to_v(hh, u):
        # F.linear(h, W.t(), v_bias) = h @ W + v_bias
        logits = lax.dot_general(hh.astype(jnp.bfloat16), W,
                                 (((1,), (0,)), ((), ())),
                                 preferred_element_type=jnp.float32) + vb
        p = jax.nn.sigmoid(logits)
        return p, (p > u).astype(jnp.float32)

    v0 = v_ref[...]
    _, h_ = v_to_h(v0, uh_ref[0])

    if k <= 8:
        # Small k: full unroll (static compile-time constant).
        pre_v_ = pre_h_ = None
        v_ = v0
        for s in range(k):
            pre_v_, v_ = h_to_v(h_, uv_ref[s])
            pre_h_, h_ = v_to_h(v_, uh_ref[s + 1])
    else:
        # Large k: rolled loop keeps instruction stream / vreg pressure flat.
        def body(s, carry):
            _, _, _, h_c = carry
            pre_v_c, v_c = h_to_v(h_c, uv_ref[s])
            pre_h_c, h_c = v_to_h(v_c, uh_ref[s + 1])
            return pre_v_c, v_c, pre_h_c, h_c

        init = (jnp.zeros_like(vb), v0, jnp.zeros_like(hb), h_)
        pre_v_, v_, pre_h_, h_ = lax.fori_loop(0, k, body, init)

    pre_h_ref[...] = pre_h_
    h_ref[...] = h_
    pre_v_ref[...] = pre_v_
    v_out_ref[...] = v_


def rbm_forward(v, W, h_bias, v_bias, key, k, *, batch_tile=256):
    """Returns (pre_h_, h_, v, pre_v_, v_) matching RBM.forward (requires k >= 1)."""
    if k < 1:
        raise ValueError("k must be >= 1 (RBM.forward is undefined for k == 0)")

    B, n_vis = v.shape
    n_hin = W.shape[0]
    f32 = jnp.float32

    # Pad feature dims to multiples of 128 (lane-dense), batch to a multiple of
    # the tile (tile itself a multiple of 8).  Zero padding of W / biases / v is
    # mathematically inert for the real units.
    nv_p = _round_up(n_vis, 128)
    nh_p = _round_up(n_hin, 128)
    tb = min(batch_tile, _round_up(B, 8))
    b_p = _round_up(B, tb)

    v_p = jnp.zeros((b_p, nv_p), f32).at[:B, :n_vis].set(v.astype(f32))
    W_p = jnp.zeros((nh_p, nv_p), f32).at[:n_hin, :n_vis].set(W.astype(f32))
    hb_p = jnp.zeros((1, nh_p), f32).at[0, :n_hin].set(h_bias.astype(f32))
    vb_p = jnp.zeros((1, nv_p), f32).at[0, :n_vis].set(v_bias.astype(f32))

    # Both orientations resident in bf16 -> no per-step transpose on the MXU path.
    W_bf = W_p.astype(jnp.bfloat16)
    Wt_bf = W_p.T.astype(jnp.bfloat16)

    # Host-side uniforms (1 + 2k Bernoulli draws per element of the chain).
    # Tiled over batch, so every tile sees an independent stream.
    k_h, k_v = jax.random.split(key)
    u_h = jax.random.uniform(k_h, (k + 1, b_p, nh_p), dtype=f32)
    u_v = jax.random.uniform(k_v, (k, b_p, nv_p), dtype=f32)

    grid = (b_p // tb,)

    out_shape = (
        jax.ShapeDtypeStruct((b_p, nh_p), f32),   # pre_h_
        jax.ShapeDtypeStruct((b_p, nh_p), f32),   # h_
        jax.ShapeDtypeStruct((b_p, nv_p), f32),   # pre_v_
        jax.ShapeDtypeStruct((b_p, nv_p), f32),   # v_
    )

    in_specs = [
        pl.BlockSpec((tb, nv_p), lambda i: (i, 0)),            # v tile
        pl.BlockSpec((nh_p, nv_p), lambda i: (0, 0)),          # W (resident)
        pl.BlockSpec((nv_p, nh_p), lambda i: (0, 0)),          # W.T (resident)
        pl.BlockSpec((1, nh_p), lambda i: (0, 0)),             # h_bias (resident)
        pl.BlockSpec((1, nv_p), lambda i: (0, 0)),             # v_bias (resident)
        pl.BlockSpec((k + 1, tb, nh_p), lambda i: (0, i, 0)),  # hidden uniforms
        pl.BlockSpec((k, tb, nv_p), lambda i: (0, i, 0)),      # visible uniforms
    ]
    out_specs = (
        pl.BlockSpec((tb, nh_p), lambda i: (i, 0)),
        pl.BlockSpec((tb, nh_p), lambda i: (i, 0)),
        pl.BlockSpec((tb, nv_p), lambda i: (i, 0)),
        pl.BlockSpec((tb, nv_p), lambda i: (i, 0)),
    )

    # Explicit VMEM budget: resident bf16 weights + 2x (double-buffered) tiles.
    bytes_w = 2 * nh_p * nv_p * 2
    bytes_in = 4 * (tb * nv_p + (k + 1) * tb * nh_p + k * tb * nv_p)
    bytes_out = 4 * 2 * (tb * nh_p + tb * nv_p)
    vmem_limit = int(min(max(bytes_w + 2 * (bytes_in + bytes_out) + (4 << 20),
                             16 << 20), 100 << 20))

    pre_h_, h_, pre_v_, v_ = pl.pallas_call(
        functools.partial(rbm_kernel, k=k),
        grid=grid,
        out_shape=out_shape,
        in_specs=in_specs,
        out_specs=out_specs,
        compiler_params=pltpu.CompilerParams(
            dimension_semantics=("parallel",),
            vmem_limit_bytes=vmem_limit,
        ),
    )(v_p, W_bf, Wt_bf, hb_p, vb_p, u_h, u_v)

    # Slice off padding; third return is the original input v (as in PyTorch).
    return (pre_h_[:B, :n_hin], h_[:B, :n_hin], v,
            pre_v_[:B, :n_vis], v_[:B, :n_vis])


if __name__ == "__main__":
    # Small shapes consistent with the module: RBM(n_vis=128, n_hin=64, k=2).
    B, n_vis, n_hin, k = 8, 128, 64, 2

    root = jax.random.PRNGKey(0)
    k_w, k_v, k_samp = jax.random.split(root, 3)

    # Deterministic parameter init (same recipe as __init__: randn*0.01, zero biases).
    W = 0.01 * jax.random.normal(k_w, (n_hin, n_vis), dtype=jnp.float32)
    v_bias = jnp.zeros((n_vis,), dtype=jnp.float32)
    h_bias = jnp.zeros((n_hin,), dtype=jnp.float32)

    # Binary visible units (typical RBM input).
    v = jax.random.bernoulli(k_v, 0.5, (B, n_vis)).astype(jnp.float32)

    outs = rbm_forward(v, W, h_bias, v_bias, k_samp, k)
    outs = jax.block_until_ready(outs)

    pre_h_, h_, v_in, pre_v_, v_samp = outs
    assert pre_h_.shape == (B, n_hin) and h_.shape == (B, n_hin)
    assert pre_v_.shape == (B, n_vis) and v_samp.shape == (B, n_vis)
    assert v_in.shape == (B, n_vis)
    # probabilities must lie strictly in (0,1); samples must be binary
    assert bool(jnp.all((pre_h_ > 0) & (pre_h_ < 1)))
    assert bool(jnp.all((pre_v_ > 0) & (pre_v_ < 1)))
    assert bool(jnp.all((h_ == 0) | (h_ == 1)))
    assert bool(jnp.all((v_samp == 0) | (v_samp == 1)))

    # TODO(synk): free_energy() is a separate training utility (not part of
    # forward) and is intentionally not implemented as a kernel here.
    print("KERNEL_OK")
</pallas_src>

<mosaic_0001>
module attributes {stable_mosaic.version = 11 : i64} {
  func.func @rbm_kernel(%arg0: i32, %arg1: memref<8x128xf32, #tpu.memory_space<vmem>>, %arg2: memref<128x128xbf16, #tpu.memory_space<vmem>>, %arg3: memref<128x128xbf16, #tpu.memory_space<vmem>>, %arg4: memref<1x128xf32, #tpu.memory_space<vmem>>, %arg5: memref<1x128xf32, #tpu.memory_space<vmem>>, %arg6: memref<3x8x128xf32, #tpu.memory_space<vmem>>, %arg7: memref<2x8x128xf32, #tpu.memory_space<vmem>>, %arg8: memref<8x128xf32, #tpu.memory_space<vmem>>, %arg9: memref<8x128xf32, #tpu.memory_space<vmem>>, %arg10: memref<8x128xf32, #tpu.memory_space<vmem>>, %arg11: memref<8x128xf32, #tpu.memory_space<vmem>>) attributes {dimension_semantics = [#tpu.dimension_semantics<parallel>], iteration_bounds = array<i64: 1>, scalar_prefetch = 0 : i64, scratch_operands = 0 : i64, tpu.core_type = #tpu.core_type<tc>, window_params = [{transform_indices = @transform_0, window_bounds = array<i64: 8, 128>}, {pipeline_mode = #tpu.pipeline_mode<synchronous>, transform_indices = @transform_1, window_bounds = array<i64: 128, 128>}, {pipeline_mode = #tpu.pipeline_mode<synchronous>, transform_indices = @transform_2, window_bounds = array<i64: 128, 128>}, {pipeline_mode = #tpu.pipeline_mode<synchronous>, transform_indices = @transform_3, window_bounds = array<i64: 1, 128>}, {pipeline_mode = #tpu.pipeline_mode<synchronous>, transform_indices = @transform_4, window_bounds = array<i64: 1, 128>}, {transform_indices = @transform_5, window_bounds = array<i64: 3, 8, 128>}, {transform_indices = @transform_6, window_bounds = array<i64: 2, 8, 128>}, {transform_indices = @transform_7, window_bounds = array<i64: 8, 128>}, {transform_indices = @transform_8, window_bounds = array<i64: 8, 128>}, {transform_indices = @transform_9, window_bounds = array<i64: 8, 128>}, {transform_indices = @transform_10, window_bounds = array<i64: 8, 128>}]} {
    %c0 = arith.constant 0 : index
    %c0_0 = arith.constant 0 : index
    %0 = vector.load %arg2[%c0, %c0_0] : memref<128x128xbf16, #tpu.memory_space<vmem>>, vector<128x128xbf16>
    %c0_1 = arith.constant 0 : index
    %c0_2 = arith.constant 0 : index
    %1 = vector.load %arg3[%c0_1, %c0_2] : memref<128x128xbf16, #tpu.memory_space<vmem>>, vector<128x128xbf16>
    %c0_3 = arith.constant 0 : index
    %c0_4 = arith.constant 0 : index
    %2 = vector.load %arg4[%c0_3, %c0_4] : memref<1x128xf32, #tpu.memory_space<vmem>>, vector<1x128xf32>
    %3 = vector.shape_cast %2 : vector<1x128xf32> to vector<1x128xf32>
    %4 = vector.broadcast %3 : vector<1x128xf32> to vector<8x128xf32>
    %c0_5 = arith.constant 0 : index
    %c0_6 = arith.constant 0 : index
    %5 = vector.load %arg5[%c0_5, %c0_6] : memref<1x128xf32, #tpu.memory_space<vmem>>, vector<1x128xf32>
    %6 = vector.shape_cast %5 : vector<1x128xf32> to vector<1x128xf32>
    %7 = vector.broadcast %6 : vector<1x128xf32> to vector<8x128xf32>
    %c0_7 = arith.constant 0 : index
    %c0_8 = arith.constant 0 : index
    %8 = vector.load %arg1[%c0_7, %c0_8] : memref<8x128xf32, #tpu.memory_space<vmem>>, vector<8x128xf32>
    %c0_9 = arith.constant 0 : index
    %c0_10 = arith.constant 0 : index
    %c0_11 = arith.constant 0 : index
    %9 = vector.load %arg6[%c0_9, %c0_10, %c0_11] : memref<3x8x128xf32, #tpu.memory_space<vmem>>, vector<1x8x128xf32>
    %10 = vector.shape_cast %9 : vector<1x8x128xf32> to vector<8x128xf32>
    %11 = arith.truncf %8 : vector<8x128xf32> to vector<8x128xbf16>
    %cst = arith.constant dense<0.000000e+00> : vector<8x128xf32>
    %12 = tpu.matmul %11, %1, %cst {dimension_numbers = #tpu.dot_dimension_numbers<[1], [0], [0], [1], [0, 0, 1, 1], [], []>} : vector<8x128xbf16>, vector<128x128xbf16>, vector<8x128xf32> -> vector<8x128xf32>
    %13 = arith.addf %12, %4 : vector<8x128xf32>
    %14 = arith.negf %13 : vector<8x128xf32>
    %15 = math.exp %14 : vector<8x128xf32>
    %cst_12 = arith.constant 1.000000e+00 : f32
    %16 = vector.broadcast %cst_12 : f32 to vector<8x128xf32>
    %17 = arith.addf %16, %15 : vector<8x128xf32>
    %18 = arith.divf %16, %17 : vector<8x128xf32>
    %19 = arith.cmpf ogt, %18, %10 : vector<8x128xf32>
    %20 = arith.extui %19 : vector<8x128xi1> to vector<8x128xi32>
    %21 = arith.sitofp %20 : vector<8x128xi32> to vector<8x128xf32>
    %c0_13 = arith.constant 0 : index
    %c0_14 = arith.constant 0 : index
    %c0_15 = arith.constant 0 : index
    %22 = vector.load %arg7[%c0_13, %c0_14, %c0_15] : memref<2x8x128xf32, #tpu.memory_space<vmem>>, vector<1x8x128xf32>
    %23 = vector.shape_cast %22 : vector<1x8x128xf32> to vector<8x128xf32>
    %24 = arith.truncf %21 : vector<8x128xf32> to vector<8x128xbf16>
    %cst_16 = arith.constant dense<0.000000e+00> : vector<8x128xf32>
    %25 = tpu.matmul %24, %0, %cst_16 {dimension_numbers = #tpu.dot_dimension_numbers<[1], [0], [0], [1], [0, 0, 1, 1], [], []>} : vector<8x128xbf16>, vector<128x128xbf16>, vector<8x128xf32> -> vector<8x128xf32>
    %26 = arith.addf %25, %7 : vector<8x128xf32>
    %27 = arith.negf %26 : vector<8x128xf32>
    %28 = math.exp %27 : vector<8x128xf32>
    %cst_17 = arith.constant 1.000000e+00 : f32
    %29 = vector.broadcast %cst_17 : f32 to vector<8x128xf32>
    %30 = arith.addf %29, %28 : vector<8x128xf32>
    %31 = arith.divf %29, %30 : vector<8x128xf32>
    %32 = arith.cmpf ogt, %31, %23 : vector<8x128xf32>
    %33 = arith.extui %32 : vector<8x128xi1> to vector<8x128xi32>
    %34 = arith.sitofp %33 : vector<8x128xi32> to vector<8x128xf32>
    %c1 = arith.constant 1 : index
    %c0_18 = arith.constant 0 : index
    %c0_19 = arith.constant 0 : index
    %35 = vector.load %arg6[%c1, %c0_18, %c0_19] : memref<3x8x128xf32, #tpu.memory_space<vmem>>, vector<1x8x128xf32>
    %36 = vector.shape_cast %35 : vector<1x8x128xf32> to vector<8x128xf32>
    %37 = arith.truncf %34 : vector<8x128xf32> to vector<8x128xbf16>
    %cst_20 = arith.constant dense<0.000000e+00> : vector<8x128xf32>
    %38 = tpu.matmul %37, %1, %cst_20 {dimension_numbers = #tpu.dot_dimension_numbers<[1], [0], [0], [1], [0, 0, 1, 1], [], []>} : vector<8x128xbf16>, vector<128x128xbf16>, vector<8x128xf32> -> vector<8x128xf32>
    %39 = arith.addf %38, %4 : vector<8x128xf32>
    %40 = arith.negf %39 : vector<8x128xf32>
    %41 = math.exp %40 : vector<8x128xf32>
    %cst_21 = arith.constant 1.000000e+00 : f32
    %42 = vector.broadcast %cst_21 : f32 to vector<8x128xf32>
    %43 = arith.addf %42, %41 : vector<8x128xf32>
    %44 = arith.divf %42, %43 : vector<8x128xf32>
    %45 = arith.cmpf ogt, %44, %36 : vector<8x128xf32>
    %46 = arith.extui %45 : vector<8x128xi1> to vector<8x128xi32>
    %47 = arith.sitofp %46 : vector<8x128xi32> to vector<8x128xf32>
    %c1_22 = arith.constant 1 : index
    %c0_23 = arith.constant 0 : index
    %c0_24 = arith.constant 0 : index
    %48 = vector.load %arg7[%c1_22, %c0_23, %c0_24] : memref<2x8x128xf32, #tpu.memory_space<vmem>>, vector<1x8x128xf32>
    %49 = vector.shape_cast %48 : vector<1x8x128xf32> to vector<8x128xf32>
    %50 = arith.truncf %47 : vector<8x128xf32> to vector<8x128xbf16>
    %cst_25 = arith.constant dense<0.000000e+00> : vector<8x128xf32>
    %51 = tpu.matmul %50, %0, %cst_25 {dimension_numbers = #tpu.dot_dimension_numbers<[1], [0], [0], [1], [0, 0, 1, 1], [], []>} : vector<8x128xbf16>, vector<128x128xbf16>, vector<8x128xf32> -> vector<8x128xf32>
    %52 = arith.addf %51, %7 : vector<8x128xf32>
    %53 = arith.negf %52 : vector<8x128xf32>
    %54 = math.exp %53 : vector<8x128xf32>
    %cst_26 = arith.constant 1.000000e+00 : f32
    %55 = vector.broadcast %cst_26 : f32 to vector<8x128xf32>
    %56 = arith.addf %55, %54 : vector<8x128xf32>
    %57 = arith.divf %55, %56 : vector<8x128xf32>
    %58 = arith.cmpf ogt, %57, %49 : vector<8x128xf32>
    %59 = arith.extui %58 : vector<8x128xi1> to vector<8x128xi32>
    %60 = arith.sitofp %59 : vector<8x128xi32> to vector<8x128xf32>
    %c2 = arith.constant 2 : index
    %c0_27 = arith.constant 0 : index
    %c0_28 = arith.constant 0 : index
    %61 = vector.load %arg6[%c2, %c0_27, %c0_28] : memref<3x8x128xf32, #tpu.memory_space<vmem>>, vector<1x8x128xf32>
    %62 = vector.shape_cast %61 : vector<1x8x128xf32> to vector<8x128xf32>
    %63 = arith.truncf %60 : vector<8x128xf32> to vector<8x128xbf16>
    %cst_29 = arith.constant dense<0.000000e+00> : vector<8x128xf32>
    %64 = tpu.matmul %63, %1, %cst_29 {dimension_numbers = #tpu.dot_dimension_numbers<[1], [0], [0], [1], [0, 0, 1, 1], [], []>} : vector<8x128xbf16>, vector<128x128xbf16>, vector<8x128xf32> -> vector<8x128xf32>
    %65 = arith.addf %64, %4 : vector<8x128xf32>
    %66 = arith.negf %65 : vector<8x128xf32>
    %67 = math.exp %66 : vector<8x128xf32>
    %cst_30 = arith.constant 1.000000e+00 : f32
    %68 = vector.broadcast %cst_30 : f32 to vector<8x128xf32>
    %69 = arith.addf %68, %67 : vector<8x128xf32>
    %70 = arith.divf %68, %69 : vector<8x128xf32>
    %71 = arith.cmpf ogt, %70, %62 : vector<8x128xf32>
    %72 = arith.extui %71 : vector<8x128xi1> to vector<8x128xi32>
    %73 = arith.sitofp %72 : vector<8x128xi32> to vector<8x128xf32>
    %c0_31 = arith.constant 0 : index
    %c0_32 = arith.constant 0 : index
    %74 = vector.load %arg8[%c0_31, %c0_32] : memref<8x128xf32, #tpu.memory_space<vmem>>, vector<8x128xf32>
    tpu.vector_store %arg8[%c0_31, %c0_32], %70 {strides = array<i32>} : memref<8x128xf32, #tpu.memory_space<vmem>>, vector<8x128xf32>,
    %c0_33 = arith.constant 0 : index
    %c0_34 = arith.constant 0 : index
    %75 = vector.load %arg9[%c0_33, %c0_34] : memref<8x128xf32, #tpu.memory_space<vmem>>, vector<8x128xf32>
    tpu.vector_store %arg9[%c0_33, %c0_34], %73 {strides = array<i32>} : memref<8x128xf32, #tpu.memory_space<vmem>>, vector<8x128xf32>,
    %c0_35 = arith.constant 0 : index
    %c0_36 = arith.constant 0 : index
    %76 = vector.load %arg10[%c0_35, %c0_36] : memref<8x128xf32, #tpu.memory_space<vmem>>, vector<8x128xf32>
    tpu.vector_store %arg10[%c0_35, %c0_36], %57 {strides = array<i32>} : memref<8x128xf32, #tpu.memory_space<vmem>>, vector<8x128xf32>,
    %c0_37 = arith.constant 0 : index
    %c0_38 = arith.constant 0 : index
    %77 = vector.load %arg11[%c0_37, %c0_38] : memref<8x128xf32, #tpu.memory_space<vmem>>, vector<8x128xf32>
    tpu.vector_store %arg11[%c0_37, %c0_38], %60 {strides = array<i32>} : memref<8x128xf32, #tpu.memory_space<vmem>>, vector<8x128xf32>,
    return
  }
  func.func @transform_0(%arg0: i32) -> (i32, i32) {
    %c0_i32 = arith.constant 0 : i32
    %c0_i32_0 = arith.constant 0 : i32
    return %arg0, %c0_i32 : i32, i32
  }
  func.func @transform_1(%arg0: i32) -> (i32, i32) {
    %c0_i32 = arith.constant 0 : i32
    %c0_i32_0 = arith.constant 0 : i32
    %c0_i32_1 = arith.constant 0 : i32
    return %c0_i32, %c0_i32_0 : i32, i32
  }
  func.func @transform_2(%arg0: i32) -> (i32, i32) {
    %c0_i32 = arith.constant 0 : i32
    %c0_i32_0 = arith.constant 0 : i32
    %c0_i32_1 = arith.constant 0 : i32
    return %c0_i32, %c0_i32_0 : i32, i32
  }
  func.func @transform_3(%arg0: i32) -> (i32, i32) {
    %c0_i32 = arith.constant 0 : i32
    %c0_i32_0 = arith.constant 0 : i32
    %c0_i32_1 = arith.constant 0 : i32
    return %c0_i32, %c0_i32_0 : i32, i32
  }
  func.func @transform_4(%arg0: i32) -> (i32, i32) {
    %c0_i32 = arith.constant 0 : i32
    %c0_i32_0 = arith.constant 0 : i32
    %c0_i32_1 = arith.constant 0 : i32
    return %c0_i32, %c0_i32_0 : i32, i32
  }
  func.func @transform_5(%arg0: i32) -> (i32, i32, i32) {
    %c0_i32 = arith.constant 0 : i32
    %c0_i32_0 = arith.constant 0 : i32
    %c0_i32_1 = arith.constant 0 : i32
    return %c0_i32, %arg0, %c0_i32_0 : i32, i32, i32
  }
  func.func @transform_6(%arg0: i32) -> (i32, i32, i32) {
    %c0_i32 = arith.constant 0 : i32
    %c0_i32_0 = arith.constant 0 : i32
    %c0_i32_1 = arith.constant 0 : i32
    return %c0_i32, %arg0, %c0_i32_0 : i32, i32, i32
  }
  func.func @transform_7(%arg0: i32) -> (i32, i32) {
    %c0_i32 = arith.constant 0 : i32
    %c0_i32_0 = arith.constant 0 : i32
    return %arg0, %c0_i32 : i32, i32
  }
  func.func @transform_8(%arg0: i32) -> (i32, i32) {
    %c0_i32 = arith.constant 0 : i32
    %c0_i32_0 = arith.constant 0 : i32
    return %arg0, %c0_i32 : i32, i32
  }
  func.func @transform_9(%arg0: i32) -> (i32, i32) {
    %c0_i32 = arith.constant 0 : i32
    %c0_i32_0 = arith.constant 0 : i32
    return %arg0, %c0_i32 : i32, i32
  }
  func.func @transform_10(%arg0: i32) -> (i32, i32) {
    %c0_i32 = arith.constant 0 : i32
    %c0_i32_0 = arith.constant 0 : i32
    return %arg0, %c0_i32 : i32, i32
  }
}

</mosaic_0001>

<llo_original>
// kernel: tpu_custom_call.1
$region0: #{tpu_custom_call.1}
  #allocation0 [shape = 'u32[]', space=smem, size = 0x4, offset = 0x4, fixed_abs, tag = 'smem constant byte address 0x4 - core index']
  #allocation1 [shape = 'u32[144,128]{1,0:T(1,128)}', space=vmem, size = 0x12000, scoped, tag = 'internal scratch']
  %s0 = inlined_call_operand.hbm [shape: f32[8,128], index: 0, kind: input, shape index: {}]
  %s1 = inlined_call_operand.hbm [shape: bf16[128,128], index: 1, kind: input, shape index: {}]
  %s2 = inlined_call_operand.hbm [shape: bf16[128,128], index: 2, kind: input, shape index: {}]
  %s3 = inlined_call_operand.vmem [shape: f32[1,128], index: 3, kind: input, shape index: {}]
  %s4 = inlined_call_operand.vmem [shape: f32[1,128], index: 4, kind: input, shape index: {}]
  %s5 = inlined_call_operand.hbm [shape: f32[3,8,128], index: 5, kind: input, shape index: {}]
  %s6 = inlined_call_operand.hbm [shape: f32[2,8,128], index: 6, kind: input, shape index: {}]
  %s7 = inlined_call_operand.hbm [shape: f32[8,128], index: 7, kind: output, shape index: {0}]
  %s8 = inlined_call_operand.hbm [shape: f32[8,128], index: 8, kind: output, shape index: {1}]
  %s9 = inlined_call_operand.hbm [shape: f32[8,128], index: 9, kind: output, shape index: {2}]
  %s10 = inlined_call_operand.hbm [shape: f32[8,128], index: 10, kind: output, shape index: {3}]
  %11 = xla_tuple %s7, %s8, %s9, %s10
  %s12 = sld [smem:[#allocation0]]
  $region82: #{tpu_custom_call.1} parent=0
    _
  %s14 = ssub.s32 1, %s12
  %s15 = scalar_select 0, %s14, %s12
  $region1: #{tpu_custom_call.1} parent=0
    #allocation2 [shape = 'u8[4096]{0}', space=vmem, size = 0x1000, scoped, tag = 'input window, operand 0, single buffered']
    #allocation3 [shape = 's32[1]{0}', space=sflag, size = 0x4, scoped, tag = 'scoped memory for tpu_custom_call.1']
    #allocation4 [shape = 's32[1]{0}', space=sflag, size = 0x4, scoped, tag = 'scoped memory for tpu_custom_call.1']
    #allocation5 [shape = 'u8[32768]{0}', space=vmem, size = 0x8000, scoped, tag = 'input window, operand 1, single buffered']
    #allocation6 [shape = 's32[1]{0}', space=sflag, size = 0x4, scoped, tag = 'scoped memory for tpu_custom_call.1']
    #allocation7 [shape = 'u8[32768]{0}', space=vmem, size = 0x8000, scoped, tag = 'input window, operand 2, single buffered']
    #allocation8 [shape = 'u8[12288]{0}', space=vmem, size = 0x3000, scoped, tag = 'input window, operand 5, single buffered']
    #allocation9 [shape = 's32[1]{0}', space=sflag, size = 0x4, scoped, tag = 'scoped memory for tpu_custom_call.1']
    #allocation10 [shape = 'u8[8192]{0}', space=vmem, size = 0x2000, scoped, tag = 'input window, operand 6, single buffered']
    #allocation11 [shape = 'u8[4096]{0}', space=vmem, size = 0x1000, scoped, tag = 'output window, operand 0, single buffered']
    #allocation12 [shape = 'u8[4096]{0}', space=vmem, size = 0x1000, scoped, tag = 'output window, operand 1, single buffered']
    #allocation13 [shape = 's32[1]{0}', space=sflag, size = 0x4, scoped, tag = 'scoped memory for tpu_custom_call.1']
    #allocation14 [shape = 'u8[4096]{0}', space=vmem, size = 0x1000, scoped, tag = 'output window, operand 2, single buffered']
    #allocation15 [shape = 'u8[4096]{0}', space=vmem, size = 0x1000, scoped, tag = 'output window, operand 3, single buffered']
    #allocation16 [shape = 's32[1]{0}', space=sflag, size = 0x4, scoped, tag = 'scoped memory for tpu_custom_call.1']
    %16 = vsyncpa [#allocation3], 0
    %17 = vsyncpa [#allocation6], 0
    %18 = vsyncpa [#allocation9], 0
    %19 = vsyncpa [#allocation4], 0
    %20 = vsyncpa [#allocation13], 0
    %21 = vsyncpa [#allocation16], 0
    // Predicated region
    $region2: #{tpu_custom_call.1} parent=1 // pred_check
      _
    $region3: #{tpu_custom_call.1} parent=1 // pred_check_branch
      %23 = sbr.rel (0) target = $region5
    $region4: #{tpu_custom_call.1} parent=1 // pred_region
      %s25 = ssub.s32 128, 128
      %26 = vsyncadd [#allocation3], %s25
      %s28 = sshll.u32 [#allocation2], 4
      %s29 = int_to_ptr.vmem [resolvable:$true] %s28
      %31 = dma.hbm_to_vmem [thread:$0]  %s0, 128, %s29, [#allocation3]
    $region5: #{tpu_custom_call.1} parent=1 // pred_fallthru
      _
    // Predicated region
    $region6: #{tpu_custom_call.1} parent=1 // pred_check
      _
    $region7: #{tpu_custom_call.1} parent=1 // pred_check_branch
      %33 = sbr.rel (0) target = $region9
    $region8: #{tpu_custom_call.1} parent=1 // pred_region
      %s35 = ssub.s32 1024, 1024
      %36 = vsyncadd [#allocation6], %s35
      %s37 = sshll.u32 [#allocation5], 4
      %s38 = int_to_ptr.vmem [resolvable:$true] %s37
      %43 = dma.hbm_to_vmem [thread:$0]  %s1, 1024, %s38, [#allocation6], 64, 64, 4
    $region9: #{tpu_custom_call.1} parent=1 // pred_fallthru
      _
    // Predicated region
    $region10: #{tpu_custom_call.1} parent=1 // pred_check
      _
    $region11: #{tpu_custom_call.1} parent=1 // pred_check_branch
      %45 = sbr.rel (0) target = $region13
    $region12: #{tpu_custom_call.1} parent=1 // pred_region
      %s47 = ssub.s32 1024, 1024
      %48 = vsyncadd [#allocation6], %s47
      %s49 = sshll.u32 [#allocation7], 4
      %s50 = int_to_ptr.vmem [resolvable:$true] %s49
      %55 = dma.hbm_to_vmem [thread:$0]  %s2, 1024, %s50, [#allocation6], 64, 64, 4
    $region13: #{tpu_custom_call.1} parent=1 // pred_fallthru
      _
    // Predicated region
    $region14: #{tpu_custom_call.1} parent=1 // pred_check
      _
    $region15: #{tpu_custom_call.1} parent=1 // pred_check_branch
      %57 = sbr.rel (0) target = $region17
    $region16: #{tpu_custom_call.1} parent=1 // pred_region
      _
    $region17: #{tpu_custom_call.1} parent=1 // pred_fallthru
      _
    // Predicated region
    $region18: #{tpu_custom_call.1} parent=1 // pred_check
      _
    $region19: #{tpu_custom_call.1} parent=1 // pred_check_branch
      %59 = sbr.rel (0) target = $region21
    $region20: #{tpu_custom_call.1} parent=1 // pred_region
      _
    $region21: #{tpu_custom_call.1} parent=1 // pred_fallthru
      _
    // Predicated region
    $region22: #{tpu_custom_call.1} parent=1 // pred_check
      _
    $region23: #{tpu_custom_call.1} parent=1 // pred_check_branch
      %61 = sbr.rel (0) target = $region25
    $region24: #{tpu_custom_call.1} parent=1 // pred_region
      %s63 = ssub.s32 384, 384
      %64 = vsyncadd [#allocation9], %s63
      %s65 = sshll.u32 [#allocation8], 4
      %s66 = int_to_ptr.vmem [resolvable:$true] %s65
      %71 = dma.hbm_to_vmem [thread:$0]  %s5, 384, %s66, [#allocation9], 128, 128, 8
    $region25: #{tpu_custom_call.1} parent=1 // pred_fallthru
      _
    // Predicated region
    $region26: #{tpu_custom_call.1} parent=1 // pred_check
      _
    $region27: #{tpu_custom_call.1} parent=1 // pred_check_branch
      %73 = sbr.rel (0) target = $region29
    $region28: #{tpu_custom_call.1} parent=1 // pred_region
      %s75 = ssub.s32 256, 256
      %76 = vsyncadd [#allocation9], %s75
      %s77 = sshll.u32 [#allocation10], 4
      %s78 = int_to_ptr.vmem [resolvable:$true] %s77
      %83 = dma.hbm_to_vmem [thread:$0]  %s6, 256, %s78, [#allocation9], 128, 128, 8
    $region29: #{tpu_custom_call.1} parent=1 // pred_fallthru
      _
    // Predicated region
    $region30: #{tpu_custom_call.1} parent=1 // pred_check
      _
    $region31: #{tpu_custom_call.1} parent=1 // pred_check_branch
      %85 = sbr.rel (0) target = $region33
    $region32: #{tpu_custom_call.1} parent=1 // pred_region
      %86 = dma.done [#allocation3], 128
    $region33: #{tpu_custom_call.1} parent=1 // pred_fallthru
      _
    // Predicated region
    $region34: #{tpu_custom_call.1} parent=1 // pred_check
      _
    $region35: #{tpu_custom_call.1} parent=1 // pred_check_branch
      %88 = sbr.rel (0) target = $region37
    $region36: #{tpu_custom_call.1} parent=1 // pred_region
      %89 = dma.done [#allocation6], 1024
    $region37: #{tpu_custom_call.1} parent=1 // pred_fallthru
      _
    // Predicated region
    $region38: #{tpu_custom_call.1} parent=1 // pred_check
      _
    $region39: #{tpu_custom_call.1} parent=1 // pred_check_branch
      %91 = sbr.rel (0) target = $region41
    $region40: #{tpu_custom_call.1} parent=1 // pred_region
      %92 = dma.done [#allocation6], 1024
    $region41: #{tpu_custom_call.1} parent=1 // pred_fallthru
      _
    // Predicated region
    $region42: #{tpu_custom_call.1} parent=1 // pred_check
      _
    $region43: #{tpu_custom_call.1} parent=1 // pred_check_branch
      %94 = sbr.rel (0) target = $region45
    $region44: #{tpu_custom_call.1} parent=1 // pred_region
      %95 = dma.done [#allocation9], 384
    $region45: #{tpu_custom_call.1} parent=1 // pred_fallthru
      _
    // Predicated region
    $region46: #{tpu_custom_call.1} parent=1 // pred_check
      _
    $region47: #{tpu_custom_call.1} parent=1 // pred_check_branch
      %97 = sbr.rel (0) target = $region49
    $region48: #{tpu_custom_call.1} parent=1 // pred_region
      %98 = dma.done [#allocation9], 256
    $region49: #{tpu_custom_call.1} parent=1 // pred_fallthru
      _
    %v100 = vld [vmem:[#allocation5] sm:$0xf]
    %v101 = vld [vmem:[#allocation5 + $0x4] sm:$0xf]
    %v102 = vld [vmem:[#allocation5 + $0x8] sm:$0xf]
    %v103 = vld [vmem:[#allocation5 + $0xc] sm:$0xf]
    %v104 = vld [vmem:[#allocation5 + $0x10] sm:$0xf]
    %v105 = vld [vmem:[#allocation5 + $0x14] sm:$0xf]
    %v106 = vld [vmem:[#allocation5 + $0x18] sm:$0xf]
    %v107 = vld [vmem:[#allocation5 + $0x1c] sm:$0xf]
    %v108 = vld [vmem:[#allocation5 + $0x20] sm:$0xf]
    %v109 = vld [vmem:[#allocation5 + $0x24] sm:$0xf]
    %v110 = vld [vmem:[#allocation5 + $0x28] sm:$0xf]
    %v111 = vld [vmem:[#allocation5 + $0x2c] sm:$0xf]
    %v112 = vld [vmem:[#allocation5 + $0x30] sm:$0xf]
    %v113 = vld [vmem:[#allocation5 + $0x34] sm:$0xf]
    %v114 = vld [vmem:[#allocation5 + $0x38] sm:$0xf]
    %v115 = vld [vmem:[#allocation5 + $0x3c] sm:$0xf]
    %v116 = vld [vmem:[#allocation7] sm:$0xf]
    %v117 = vld [vmem:[#allocation7 + $0x4] sm:$0xf]
    %v118 = vld [vmem:[#allocation7 + $0x8] sm:$0xf]
    %v119 = vld [vmem:[#allocation7 + $0xc] sm:$0xf]
    %v120 = vld [vmem:[#allocation7 + $0x10] sm:$0xf]
    %v121 = vld [vmem:[#allocation7 + $0x14] sm:$0xf]
    %v122 = vld [vmem:[#allocation7 + $0x18] sm:$0xf]
    %v123 = vld [vmem:[#allocation7 + $0x1c] sm:$0xf]
    %v124 = vld [vmem:[#allocation7 + $0x20] sm:$0xf]
    %v125 = vld [vmem:[#allocation7 + $0x24] sm:$0xf]
    %v126 = vld [vmem:[#allocation7 + $0x28] sm:$0xf]
    %v127 = vld [vmem:[#allocation7 + $0x2c] sm:$0xf]
    %v128 = vld [vmem:[#allocation7 + $0x30] sm:$0xf]
    %v129 = vld [vmem:[#allocation7 + $0x34] sm:$0xf]
    %v130 = vld [vmem:[#allocation7 + $0x38] sm:$0xf]
    %v131 = vld [vmem:[#allocation7 + $0x3c] sm:$0xf]
    %v132 = vld [vmem:[%s3] sm:$0x1]
    %v134 = vlaneseq
    %v135 = vshrl.u32 %v134, 7
    %v136 = vsub.s32 0, %v135
    %v137 = vrot.slane %v132, %v136
    %v139 = vld [vmem:[%s4] sm:$0x1]
    %v141 = vlaneseq
    %v142 = vshrl.u32 %v141, 7
    %v143 = vsub.s32 0, %v142
    %v144 = vrot.slane %v139, %v143
    %v146 = vld [vmem:[#allocation2] sm:$0xff]
    %v147 = vld [vmem:[#allocation8] sm:$0xff]
    %v148 = vpack.c.bf16 %v146, %v146
    %v165 = vunpack.c.l.b16 %v116
    %v166 = vunpack.c.l.b16 %v117
    %v167 = vunpack.c.l.b16 %v118
    %v168 = vunpack.c.l.b16 %v119
    %v169 = vunpack.c.l.b16 %v120
    %v170 = vunpack.c.l.b16 %v121
    %v171 = vunpack.c.l.b16 %v122
    %v172 = vunpack.c.l.b16 %v123
    %v173 = vunpack.c.l.b16 %v124
    %v174 = vunpack.c.l.b16 %v125
    %v175 = vunpack.c.l.b16 %v126
    %v176 = vunpack.c.l.b16 %v127
    %v177 = vunpack.c.l.b16 %v128
    %v178 = vunpack.c.l.b16 %v129
    %v179 = vunpack.c.l.b16 %v130
    %v180 = vunpack.c.l.b16 %v131
    %v181 = vpack.c.b16 %v166, %v165
    %v182 = vpack.c.b16 %v168, %v167
    %v183 = vpack.c.b16 %v170, %v169
    %v184 = vpack.c.b16 %v172, %v171
    %v185 = vpack.c.b16 %v174, %v173
    %v186 = vpack.c.b16 %v176, %v175
    %v187 = vpack.c.b16 %v178, %v177
    %v188 = vpack.c.b16 %v180, %v179
    %197 = vmatprep.subr.bf16.mxu0 0
    %198 = vmatpush1.bf16.msra.mxu0 %v188
    %199 = vmatprep.subr.bf16.mxu0 0
    %200 = vmatpush1.bf16.msra.mxu0 %v187
    %201 = vmatprep.subr.bf16.mxu0 0
    %202 = vmatpush1.bf16.msra.mxu0 %v186
    %203 = vmatprep.subr.bf16.mxu0 0
    %204 = vmatpush1.bf16.msra.mxu0 %v185
    %205 = vmatprep.subr.bf16.mxu0 0
    %206 = vmatpush1.bf16.msra.mxu0 %v184
    %207 = vmatprep.subr.bf16.mxu0 0
    %208 = vmatpush1.bf16.msra.mxu0 %v183
    %209 = vmatprep.subr.bf16.mxu0 0
    %210 = vmatpush1.bf16.msra.mxu0 %v182
    %211 = vmatprep.subr.bf16.mxu0 0
    %212 = vmatpush1.bf16.msra.mxu0 %v181
    %213 = vmatprep.subr.bf16.mxu0 0
    %214 = vmatpush2.bf16.msra.mxu0 0
    %215 = vmatprep.subr.bf16.mxu0 0
    %216 = vmatpush2.bf16.msra.mxu0 0
    %217 = vmatprep.subr.bf16.mxu0 0
    %218 = vmatpush2.bf16.msra.mxu0 0
    %219 = vmatprep.subr.bf16.mxu0 0
    %220 = vmatpush2.bf16.msra.mxu0 0
    %221 = vmatprep.subr.bf16.mxu0 0
    %222 = vmatpush2.bf16.msra.mxu0 0
    %223 = vmatprep.subr.bf16.mxu0 0
    %224 = vmatpush2.bf16.msra.mxu0 0
    %225 = vmatprep.subr.bf16.mxu0 0
    %226 = vmatpush2.bf16.msra.mxu0 0
    %227 = vmatprep.subr.bf16.mxu0 0
    %228 = vmatpush2.bf16.msra.mxu0 0
    %229 = vmatprep.mubr.bf16.mxu0 0
    %230 = vmatmul.mubr.bf16.gmra.mxu0 %v148
    %v231 = vpop.f32.mrf.mxu0
    %v232 = vadd.f32 %v137, %v231
    %v233 = vpop.f32.mrf.mxu0
    %v234 = vpop.f32.mrf.mxu0
    %v235 = vpop.f32.mrf.mxu0
    %236 = vdwg.mxu0
    %v237 = vxor.u32 %v232, 2147483648
    %v238 = vmul.f32 %v237, 1.442695
    %v239 = vpow.pop %v238
    %v240 = vadd.f32 %v239, 1.0
    %v241 = vrcp.pop %v240
    %v242 = vmul.f32 1.0, %v241
    %vm243 = vcmp.gt.f32.partialorder %v242, %v147
    %v244 = vld [vmem:[#allocation10] sm:$0xff]
    %v245 = vsel %vm243, 1, 0
    %v246 = vcvt.s32.f32 %v245
    %v247 = vpack.c.bf16 %v246, %v246
    %v264 = vunpack.c.l.b16 %v100
    %v265 = vunpack.c.l.b16 %v101
    %v266 = vunpack.c.l.b16 %v102
    %v267 = vunpack.c.l.b16 %v103
    %v268 = vunpack.c.l.b16 %v104
    %v269 = vunpack.c.l.b16 %v105
    %v270 = vunpack.c.l.b16 %v106
    %v271 = vunpack.c.l.b16 %v107
    %v272 = vunpack.c.l.b16 %v108
    %v273 = vunpack.c.l.b16 %v109
    %v274 = vunpack.c.l.b16 %v110
    %v275 = vunpack.c.l.b16 %v111
    %v276 = vunpack.c.l.b16 %v112
    %v277 = vunpack.c.l.b16 %v113
    %v278 = vunpack.c.l.b16 %v114
    %v279 = vunpack.c.l.b16 %v115
    %v280 = vpack.c.b16 %v265, %v264
    %v281 = vpack.c.b16 %v267, %v266
    %v282 = vpack.c.b16 %v269, %v268
    %v283 = vpack.c.b16 %v271, %v270
    %v284 = vpack.c.b16 %v273, %v272
    %v285 = vpack.c.b16 %v275, %v274
    %v286 = vpack.c.b16 %v277, %v276
    %v287 = vpack.c.b16 %v279, %v278
    %296 = vmatprep.subr.bf16.mxu0 0
    %297 = vmatpush1.bf16.msra.mxu0 %v287
    %298 = vmatprep.subr.bf16.mxu0 0
    %299 = vmatpush1.bf16.msra.mxu0 %v286
    %300 = vmatprep.subr.bf16.mxu0 0
    %301 = vmatpush1.bf16.msra.mxu0 %v285
    %302 = vmatprep.subr.bf16.mxu0 0
    %303 = vmatpush1.bf16.msra.mxu0 %v284
    %304 = vmatprep.subr.bf16.mxu0 0
    %305 = vmatpush1.bf16.msra.mxu0 %v283
    %306 = vmatprep.subr.bf16.mxu0 0
    %307 = vmatpush1.bf16.msra.mxu0 %v282
    %308 = vmatprep.subr.bf16.mxu0 0
    %309 = vmatpush1.bf16.msra.mxu0 %v281
    %310 = vmatprep.subr.bf16.mxu0 0
    %311 = vmatpush1.bf16.msra.mxu0 %v280
    %312 = vmatprep.subr.bf16.mxu0 0
    %313 = vmatpush2.bf16.msra.mxu0 0
    %314 = vmatprep.subr.bf16.mxu0 0
    %315 = vmatpush2.bf16.msra.mxu0 0
    %316 = vmatprep.subr.bf16.mxu0 0
    %317 = vmatpush2.bf16.msra.mxu0 0
    %318 = vmatprep.subr.bf16.mxu0 0
    %319 = vmatpush2.bf16.msra.mxu0 0
    %320 = vmatprep.subr.bf16.mxu0 0
    %321 = vmatpush2.bf16.msra.mxu0 0
    %322 = vmatprep.subr.bf16.mxu0 0
    %323 = vmatpush2.bf16.msra.mxu0 0
    %324 = vmatprep.subr.bf16.mxu0 0
    %325 = vmatpush2.bf16.msra.mxu0 0
    %326 = vmatprep.subr.bf16.mxu0 0
    %327 = vmatpush2.bf16.msra.mxu0 0
    %328 = vmatprep.mubr.bf16.mxu0 0
    %329 = vmatmul.mubr.bf16.gmra.mxu0 %v247
    %v330 = vpop.f32.mrf.mxu0
    %v331 = vadd.f32 %v144, %v330
    %v332 = vpop.f32.mrf.mxu0
    %v333 = vpop.f32.mrf.mxu0
    %v334 = vpop.f32.mrf.mxu0
    %335 = vdwg.mxu0
    %v336 = vxor.u32 %v331, 2147483648
    %v337 = vmul.f32 %v336, 1.442695
    %v338 = vpow.pop %v337
    %v339 = vadd.f32 %v338, 1.0
    %v340 = vrcp.pop %v339
    %v341 = vmul.f32 1.0, %v340
    %vm342 = vcmp.gt.f32.partialorder %v341, %v244
    %s343 = scalar_lea.vmem [#allocation8], 8
    %v344 = vld [vmem:[%s343] sm:$0xff]
    %v345 = vsel %vm342, 1, 0
    %v346 = vcvt.s32.f32 %v345
    %v347 = vpack.c.bf16 %v346, %v346
    %348 = vmatprep.subr.bf16.mxu0 0
    %349 = vmatpush1.bf16.msra.mxu0 %v188
    %350 = vmatprep.subr.bf16.mxu0 0
    %351 = vmatpush1.bf16.msra.mxu0 %v187
    %352 = vmatprep.subr.bf16.mxu0 0
    %353 = vmatpush1.bf16.msra.mxu0 %v186
    %354 = vmatprep.subr.bf16.mxu0 0
    %355 = vmatpush1.bf16.msra.mxu0 %v185
    %356 = vmatprep.subr.bf16.mxu0 0
    %357 = vmatpush1.bf16.msra.mxu0 %v184
    %358 = vmatprep.subr.bf16.mxu0 0
    %359 = vmatpush1.bf16.msra.mxu0 %v183
    %360 = vmatprep.subr.bf16.mxu0 0
    %361 = vmatpush1.bf16.msra.mxu0 %v182
    %362 = vmatprep.subr.bf16.mxu0 0
    %363 = vmatpush1.bf16.msra.mxu0 %v181
    %364 = vmatprep.subr.bf16.mxu0 0
    %365 = vmatpush2.bf16.msra.mxu0 0
    %366 = vmatprep.subr.bf16.mxu0 0
    %367 = vmatpush2.bf16.msra.mxu0 0
    %368 = vmatprep.subr.bf16.mxu0 0
    %369 = vmatpush2.bf16.msra.mxu0 0
    %370 = vmatprep.subr.bf16.mxu0 0
    %371 = vmatpush2.bf16.msra.mxu0 0
    %372 = vmatprep.subr.bf16.mxu0 0
    %373 = vmatpush2.bf16.msra.mxu0 0
    %374 = vmatprep.subr.bf16.mxu0 0
    %375 = vmatpush2.bf16.msra.mxu0 0
    %376 = vmatprep.subr.bf16.mxu0 0
    %377 = vmatpush2.bf16.msra.mxu0 0
    %378 = vmatprep.subr.bf16.mxu0 0
    %379 = vmatpush2.bf16.msra.mxu0 0
    %380 = vmatprep.mubr.bf16.mxu0 0
    %381 = vmatmul.mubr.bf16.gmra.mxu0 %v347
    %v382 = vpop.f32.mrf.mxu0
    %v383 = vadd.f32 %v137, %v382
    %v384 = vpop.f32.mrf.mxu0
    %v385 = vpop.f32.mrf.mxu0
    %v386 = vpop.f32.mrf.mxu0
    %387 = vdwg.mxu0
    %v388 = vxor.u32 %v383, 2147483648
    %v389 = vmul.f32 %v388, 1.442695
    %v390 = vpow.pop %v389
    %v391 = vadd.f32 %v390, 1.0
    %v392 = vrcp.pop %v391
    %v393 = vmul.f32 1.0, %v392
    %vm394 = vcmp.gt.f32.partialorder %v393, %v344
    %s395 = scalar_lea.vmem [#allocation10], 8
    %v396 = vld [vmem:[%s395] sm:$0xff]
    %v397 = vsel %vm394, 1, 0
    %v398 = vcvt.s32.f32 %v397
    %v399 = vpack.c.bf16 %v398, %v398
    %400 = vmatprep.subr.bf16.mxu0 0
    %401 = vmatpush1.bf16.msra.mxu0 %v287
    %402 = vmatprep.subr.bf16.mxu0 0
    %403 = vmatpush1.bf16.msra.mxu0 %v286
    %404 = vmatprep.subr.bf16.mxu0 0
    %405 = vmatpush1.bf16.msra.mxu0 %v285
    %406 = vmatprep.subr.bf16.mxu0 0
    %407 = vmatpush1.bf16.msra.mxu0 %v284
    %408 = vmatprep.subr.bf16.mxu0 0
    %409 = vmatpush1.bf16.msra.mxu0 %v283
    %410 = vmatprep.subr.bf16.mxu0 0
    %411 = vmatpush1.bf16.msra.mxu0 %v282
    %412 = vmatprep.subr.bf16.mxu0 0
    %413 = vmatpush1.bf16.msra.mxu0 %v281
    %414 = vmatprep.subr.bf16.mxu0 0
    %415 = vmatpush1.bf16.msra.mxu0 %v280
    %416 = vmatprep.subr.bf16.mxu0 0
    %417 = vmatpush2.bf16.msra.mxu0 0
    %418 = vmatprep.subr.bf16.mxu0 0
    %419 = vmatpush2.bf16.msra.mxu0 0
    %420 = vmatprep.subr.bf16.mxu0 0
    %421 = vmatpush2.bf16.msra.mxu0 0
    %422 = vmatprep.subr.bf16.mxu0 0
    %423 = vmatpush2.bf16.msra.mxu0 0
    %424 = vmatprep.subr.bf16.mxu0 0
    %425 = vmatpush2.bf16.msra.mxu0 0
    %426 = vmatprep.subr.bf16.mxu0 0
    %427 = vmatpush2.bf16.msra.mxu0 0
    %428 = vmatprep.subr.bf16.mxu0 0
    %429 = vmatpush2.bf16.msra.mxu0 0
    %430 = vmatprep.subr.bf16.mxu0 0
    %431 = vmatpush2.bf16.msra.mxu0 0
    %432 = vmatprep.mubr.bf16.mxu0 0
    %433 = vmatmul.mubr.bf16.gmra.mxu0 %v399
    %v434 = vpop.f32.mrf.mxu0
    %v435 = vadd.f32 %v144, %v434
    %v436 = vpop.f32.mrf.mxu0
    %v437 = vpop.f32.mrf.mxu0
    %v438 = vpop.f32.mrf.mxu0
    %439 = vdwg.mxu0
    %v440 = vxor.u32 %v435, 2147483648
    %v441 = vmul.f32 %v440, 1.442695
    %v442 = vpow.pop %v441
    %v443 = vadd.f32 %v442, 1.0
    %v444 = vrcp.pop %v443
    %v445 = vmul.f32 1.0, %v444
    %vm446 = vcmp.gt.f32.partialorder %v445, %v396
    %v447 = vsel %vm446, 1, 0
    %v448 = vcvt.s32.f32 %v447
    %s449 = scalar_lea.vmem [#allocation8], 16
    %v450 = vld [vmem:[%s449] sm:$0xff]
    %v451 = vpack.c.bf16 %v448, %v448
    %452 = vmatprep.subr.bf16.mxu0 0
    %453 = vmatpush1.bf16.msra.mxu0 %v188
    %454 = vmatprep.subr.bf16.mxu0 0
    %455 = vmatpush1.bf16.msra.mxu0 %v187
    %456 = vmatprep.subr.bf16.mxu0 0
    %457 = vmatpush1.bf16.msra.mxu0 %v186
    %458 = vmatprep.subr.bf16.mxu0 0
    %459 = vmatpush1.bf16.msra.mxu0 %v185
    %460 = vmatprep.subr.bf16.mxu0 0
    %461 = vmatpush1.bf16.msra.mxu0 %v184
    %462 = vmatprep.subr.bf16.mxu0 0
    %463 = vmatpush1.bf16.msra.mxu0 %v183
    %464 = vmatprep.subr.bf16.mxu0 0
    %465 = vmatpush1.bf16.msra.mxu0 %v182
    %466 = vmatprep.subr.bf16.mxu0 0
    %467 = vmatpush1.bf16.msra.mxu0 %v181
    %468 = vmatprep.subr.bf16.mxu0 0
    %469 = vmatpush2.bf16.msra.mxu0 0
    %470 = vmatprep.subr.bf16.mxu0 0
    %471 = vmatpush2.bf16.msra.mxu0 0
    %472 = vmatprep.subr.bf16.mxu0 0
    %473 = vmatpush2.bf16.msra.mxu0 0
    %474 = vmatprep.subr.bf16.mxu0 0
    %475 = vmatpush2.bf16.msra.mxu0 0
    %476 = vmatprep.subr.bf16.mxu0 0
    %477 = vmatpush2.bf16.msra.mxu0 0
    %478 = vmatprep.subr.bf16.mxu0 0
    %479 = vmatpush2.bf16.msra.mxu0 0
    %480 = vmatprep.subr.bf16.mxu0 0
    %481 = vmatpush2.bf16.msra.mxu0 0
    %482 = vmatprep.subr.bf16.mxu0 0
    %483 = vmatpush2.bf16.msra.mxu0 0
    %484 = vmatprep.mubr.bf16.mxu0 0
    %485 = vmatmul.mubr.bf16.gmra.mxu0 %v451
    %v486 = vpop.f32.mrf.mxu0
    %v487 = vadd.f32 %v137, %v486
    %v488 = vpop.f32.mrf.mxu0
    %v489 = vpop.f32.mrf.mxu0
    %v490 = vpop.f32.mrf.mxu0
    %491 = vdwg.mxu0
    %v492 = vxor.u32 %v487, 2147483648
    %v493 = vmul.f32 %v492, 1.442695
    %v494 = vpow.pop %v493
    %v495 = vadd.f32 %v494, 1.0
    %v496 = vrcp.pop %v495
    %v497 = vmul.f32 1.0, %v496
    %vm498 = vcmp.gt.f32.partialorder %v497, %v450
    %v499 = vsel %vm498, 1, 0
    %v500 = vcvt.s32.f32 %v499
    %501 = vst [vmem:[#allocation11] sm:$0xff] %v497
    %502 = vst [vmem:[#allocation12] sm:$0xff] %v500
    %503 = vst [vmem:[#allocation14] sm:$0xff] %v445
    %504 = vst [vmem:[#allocation15] sm:$0xff] %v448
    // Predicated region
    $region50: #{tpu_custom_call.1} parent=1 // pred_check
      _
    $region51: #{tpu_custom_call.1} parent=1 // pred_check_branch
      %506 = sbr.rel (0) target = $region53
    $region52: #{tpu_custom_call.1} parent=1 // pred_region
      %s508 = ssub.s32 128, 128
      %509 = vsyncadd [#allocation4], %s508
      %s511 = sshll.u32 [#allocation11], 4
      %s512 = int_to_ptr.vmem [resolvable:$true] %s511
      %514 = dma.vmem_to_hbm [thread:$0]  %s512, 128, %s7, [#allocation4]
    $region53: #{tpu_custom_call.1} parent=1 // pred_fallthru
      _
    // Predicated region
    $region54: #{tpu_custom_call.1} parent=1 // pred_check
      _
    $region55: #{tpu_custom_call.1} parent=1 // pred_check_branch
      %516 = sbr.rel (0) target = $region57
    $region56: #{tpu_custom_call.1} parent=1 // pred_region
      %s518 = ssub.s32 128, 128
      %519 = vsyncadd [#allocation13], %s518
      %s521 = sshll.u32 [#allocation12], 4
      %s522 = int_to_ptr.vmem [resolvable:$true] %s521
      %524 = dma.vmem_to_hbm [thread:$0]  %s522, 128, %s8, [#allocation13]
    $region57: #{tpu_custom_call.1} parent=1 // pred_fallthru
      _
    // Predicated region
    $region58: #{tpu_custom_call.1} parent=1 // pred_check
      _
    $region59: #{tpu_custom_call.1} parent=1 // pred_check_branch
      %526 = sbr.rel (0) target = $region61
    $region60: #{tpu_custom_call.1} parent=1 // pred_region
      %s528 = ssub.s32 128, 128
      %529 = vsyncadd [#allocation13], %s528
      %s531 = sshll.u32 [#allocation14], 4
      %s532 = int_to_ptr.vmem [resolvable:$true] %s531
      %534 = dma.vmem_to_hbm [thread:$0]  %s532, 128, %s9, [#allocation13]
    $region61: #{tpu_custom_call.1} parent=1 // pred_fallthru
      _
    // Predicated region
    $region62: #{tpu_custom_call.1} parent=1 // pred_check
      _
    $region63: #{tpu_custom_call.1} parent=1 // pred_check_branch
      %536 = sbr.rel (0) target = $region65
    $region64: #{tpu_custom_call.1} parent=1 // pred_region
      %s538 = ssub.s32 128, 128
      %539 = vsyncadd [#allocation16], %s538
      %s541 = sshll.u32 [#allocation15], 4
      %s542 = int_to_ptr.vmem [resolvable:$true] %s541
      %544 = dma.vmem_to_hbm [thread:$0]  %s542, 128, %s10, [#allocation16]
    $region65: #{tpu_custom_call.1} parent=1 // pred_fallthru
      _
    // Predicated region
    $region66: #{tpu_custom_call.1} parent=1 // pred_check
      _
    $region67: #{tpu_custom_call.1} parent=1 // pred_check_branch
      %546 = sbr.rel (0) target = $region69
    $region68: #{tpu_custom_call.1} parent=1 // pred_region
      %547 = dma.done [#allocation4], 128
    $region69: #{tpu_custom_call.1} parent=1 // pred_fallthru
      _
    // Predicated region
    $region70: #{tpu_custom_call.1} parent=1 // pred_check
      _
    $region71: #{tpu_custom_call.1} parent=1 // pred_check_branch
      %549 = sbr.rel (0) target = $region73
    $region72: #{tpu_custom_call.1} parent=1 // pred_region
      %550 = dma.done [#allocation13], 128
    $region73: #{tpu_custom_call.1} parent=1 // pred_fallthru
      _
    // Predicated region
    $region74: #{tpu_custom_call.1} parent=1 // pred_check
      _
    $region75: #{tpu_custom_call.1} parent=1 // pred_check_branch
      %552 = sbr.rel (0) target = $region77
    $region76: #{tpu_custom_call.1} parent=1 // pred_region
      %553 = dma.done [#allocation13], 128
    $region77: #{tpu_custom_call.1} parent=1 // pred_fallthru
      _
    // Predicated region
    $region78: #{tpu_custom_call.1} parent=1 // pred_check
      _
    $region79: #{tpu_custom_call.1} parent=1 // pred_check_branch
      %555 = sbr.rel (0) target = $region81
    $region80: #{tpu_custom_call.1} parent=1 // pred_region
      %556 = dma.done [#allocation16], 128
    $region81: #{tpu_custom_call.1} parent=1 // pred_fallthru
      _
    %557 = vsyncpa [#allocation3], 1
    %558 = vsyncpa [#allocation6], 1
    %559 = vsyncpa [#allocation9], 1
    %560 = vsyncpa [#allocation4], 1
    %561 = vsyncpa [#allocation13], 1
    %562 = vsyncpa [#allocation16], 1

</llo_original>
